<compile_context>
chip_gen: v7x
topology: tpu7x:2x2x1
jax: 0.10.0
libtpu: 0.0.40
codegen_flags: <defaults>
</compile_context>

<pallas_src>
import jax
import jax.numpy as jnp
from jax.experimental import pallas as pl
from jax.experimental.pallas import tpu as pltpu


def _round_up(a, m):
    return -(-a // m) * m


def router_top1_kernel(x_ref, w_ref, b_ref, o_ref):
    # x_ref: (TB, F) f32, w_ref: (E, F) f32, b_ref: (1, E) f32,
    # o_ref: (1, 1, TB) int32
    logits = jax.lax.dot_general(
        x_ref[...], w_ref[...],
        dimension_numbers=(((1,), (1,)), ((), ())),   # contract F, i.e. x @ W^T
        preferred_element_type=jnp.float32,
    ) + b_ref[...]                                    # (TB, E) f32

    # argmax along experts with first-index tie-breaking (matches torch.argmax).
    max_val = jnp.max(logits, axis=1, keepdims=True)                   # (TB, 1)
    lane_idx = jax.lax.broadcasted_iota(jnp.int32, logits.shape, 1)    # (TB, E)
    sentinel = jnp.iinfo(jnp.int32).max
    idx = jnp.min(jnp.where(logits == max_val, lane_idx, sentinel), axis=1)

    o_ref[0, 0, :] = idx.astype(jnp.int32)            # lane-dense store


def router_top1(x, weight, bias, *, tb=None):
    """x: (B, C, H, W) f32; weight: (num_experts, F) f32; bias: (num_experts,) f32.

    Returns int32 (B,) of top-1 expert indices (same as torch.argmax(..., dim=1)).
    """
    num_experts, feat = weight.shape
    B = x.shape[0]
    x_flat = x.reshape(B, -1)          # pure reshape: no HBM copy, no dtype cast
    assert x_flat.shape[1] == feat
    itemsize = x_flat.dtype.itemsize

    # ---- batch-tile selection -------------------------------------------------
    if tb is None:
        # One x buffer <= ~6 MiB so the double-buffered stream stays well under
        # v5e's 16 MiB default scoped VMEM; cap rows at 1024 (roofline plateau).
        cap = (6 << 20) // (feat * itemsize)
        cap = max(8, min(1024, (cap // 8) * 8))
        if B <= cap:
            if B >= 64:
                # at least 2 grid steps so both v7x TensorCores get work
                tb = min(cap, _round_up(pl.cdiv(B, 2), 8))
            else:
                tb = B                 # single tile == full dim (no 8-div needed)
        else:
            tb = cap
    num_tiles = pl.cdiv(B, tb)
    # NOTE: no host-side pad.  The last x block may be partial; its garbage
    # rows only produce garbage output rows, which are discarded by `[:B]`
    # (argmax is strictly row-wise).

    b2 = bias.reshape(1, num_experts)  # keep native f32; reshape is free

    # ---- VMEM budget (explicit: v5e default scoped limit is only 16 MiB) ------
    x_buf = tb * feat * itemsize
    w_buf = _round_up(num_experts, 8) * feat * 4
    o_buf = 8 * _round_up(tb, 128) * 4
    b_buf = 8 * 128 * 4
    vmem_bytes = 2 * (x_buf + w_buf + o_buf + b_buf) + (2 << 20)
    vmem_limit = int(min(60 << 20, max(vmem_bytes, 16 << 20)))

    cost = pl.CostEstimate(
        flops=2 * B * feat * num_experts,
        transcendentals=0,
        bytes_accessed=(x_flat.size * itemsize
                        + weight.size * weight.dtype.itemsize
                        + b2.size * 4
                        + num_tiles * tb * 4),
    )

    grid_spec = pltpu.PrefetchScalarGridSpec(
        num_scalar_prefetch=0,
        grid=(num_tiles,),
        in_specs=[
            pl.BlockSpec((tb, feat), lambda i: (i, 0)),            # x tile, pipelined
            pl.BlockSpec((num_experts, feat), lambda i: (0, 0)),   # weight, VMEM-resident
            pl.BlockSpec((1, num_experts), lambda i: (0, 0)),      # bias, VMEM-resident
        ],
        out_specs=pl.BlockSpec((1, 1, tb), lambda i: (i, 0, 0)),   # lane-dense indices
    )

    out = pl.pallas_call(
        router_top1_kernel,
        out_shape=jax.ShapeDtypeStruct((num_tiles, 1, tb), jnp.int32),
        grid_spec=grid_spec,
        compiler_params=pltpu.CompilerParams(
            dimension_semantics=("parallel",),
            vmem_limit_bytes=vmem_limit),
        cost_estimate=cost,
    )(x_flat, weight, b2)

    return out.reshape(-1)[:B]   # (B,) int32 — matches torch.argmax(..., dim=1)


if __name__ == "__main__":
    # Small shapes consistent with the module: batch=2, size=16, num_experts=4
    batch, size, num_experts = 2, 16, 4
    feat = 3 * size * size  # 768

    key = jax.random.PRNGKey(0)
    kx, kw, kb = jax.random.split(key, 3)

    x = jax.random.normal(kx, (batch, 3, size, size), dtype=jnp.float32)
    # Deterministic init mimicking nn.Linear's uniform(-1/sqrt(fan_in), +...)
    bound = 1.0 / jnp.sqrt(jnp.float32(feat))
    weight = jax.random.uniform(kw, (num_experts, feat), jnp.float32,
                                minval=-bound, maxval=bound)
    bias = jax.random.uniform(kb, (num_experts,), jnp.float32,
                              minval=-bound, maxval=bound)

    top1 = jax.block_until_ready(router_top1(x, weight, bias))

    # Pure-JAX f32 reference (same precision policy as the kernel: f32 inputs,
    # f32 accumulation), so argmax behaviour matches the PyTorch module.
    x_flat = x.reshape(batch, -1)
    ref_logits = jnp.dot(x_flat, weight.T,
                         preferred_element_type=jnp.float32) + bias
    ref_top1 = jnp.argmax(ref_logits, axis=1).astype(jnp.int32)

    assert top1.shape == (batch,)
    assert top1.dtype == jnp.int32
    assert bool(jnp.all((top1 >= 0) & (top1 < num_experts)))
    assert jnp.array_equal(top1, ref_top1), (top1, ref_top1)

    print("KERNEL_OK")
</pallas_src>

<mosaic_0001>
module attributes {stable_mosaic.version = 11 : i64} {
  func.func @router_top1_kernel(%arg0: i32, %arg1: memref<2x768xf32, #tpu.memory_space<vmem>>, %arg2: memref<4x768xf32, #tpu.memory_space<vmem>>, %arg3: memref<1x4xf32, #tpu.memory_space<vmem>>, %arg4: memref<1x1x2xi32, #tpu.memory_space<vmem>>) attributes {dimension_semantics = [#tpu.dimension_semantics<parallel>], iteration_bounds = array<i64: 1>, scalar_prefetch = 0 : i64, scratch_operands = 0 : i64, tpu.core_type = #tpu.core_type<tc>, window_params = [{transform_indices = @transform_0, window_bounds = array<i64: 2, 768>}, {pipeline_mode = #tpu.pipeline_mode<synchronous>, transform_indices = @transform_1, window_bounds = array<i64: 4, 768>}, {pipeline_mode = #tpu.pipeline_mode<synchronous>, transform_indices = @transform_2, window_bounds = array<i64: 1, 4>}, {transform_indices = @transform_3, window_bounds = array<i64: 1, 1, 2>}]} {
    %c0 = arith.constant 0 : index
    %c0_0 = arith.constant 0 : index
    %0 = vector.load %arg1[%c0, %c0_0] : memref<2x768xf32, #tpu.memory_space<vmem>>, vector<2x768xf32>
    %c0_1 = arith.constant 0 : index
    %c0_2 = arith.constant 0 : index
    %1 = vector.load %arg2[%c0_1, %c0_2] : memref<4x768xf32, #tpu.memory_space<vmem>>, vector<4x768xf32>
    %cst = arith.constant dense<0.000000e+00> : vector<2x4xf32>
    %2 = tpu.matmul %0, %1, %cst {dimension_numbers = #tpu.dot_dimension_numbers<[1], [1], [0], [0], [0, 0, 1, 0], [], []>} : vector<2x768xf32>, vector<4x768xf32>, vector<2x4xf32> -> vector<2x4xf32>
    %c0_3 = arith.constant 0 : index
    %c0_4 = arith.constant 0 : index
    %3 = vector.load %arg3[%c0_3, %c0_4] : memref<1x4xf32, #tpu.memory_space<vmem>>, vector<1x4xf32>
    %4 = vector.broadcast %3 : vector<1x4xf32> to vector<2x4xf32>
    %5 = arith.addf %2, %4 : vector<2x4xf32>
    %cst_5 = arith.constant dense<0xFF800000> : vector<2xf32>
    %6 = vector.multi_reduction <maximumf>, %5, %cst_5 [1] : vector<2x4xf32> to vector<2xf32>
    %7 = vector.shape_cast %6 : vector<2xf32> to vector<2x1xf32>
    %8 = tpu.iota {dimensions = array<i32: 1>} : vector<2x4xi32>
    %9 = vector.broadcast %7 : vector<2x1xf32> to vector<2x4xf32>
    %10 = arith.cmpf oeq, %5, %9 : vector<2x4xf32>
    %c2147483647_i32 = arith.constant 2147483647 : i32
    %11 = vector.broadcast %c2147483647_i32 : i32 to vector<2x4xi32>
    %12 = arith.select %10, %8, %11 : vector<2x4xi1>, vector<2x4xi32>
    %cst_6 = arith.constant dense<2147483647> : vector<2xi32>
    %13 = vector.multi_reduction <minsi>, %12, %cst_6 [1] : vector<2x4xi32> to vector<2xi32>
    %c0_7 = arith.constant 0 : index
    %c0_8 = arith.constant 0 : index
    %c0_9 = arith.constant 0 : index
    %14 = vector.load %arg4[%c0_7, %c0_8, %c0_9] : memref<1x1x2xi32, #tpu.memory_space<vmem>>, vector<1x1x2xi32>
    %15 = vector.shape_cast %14 : vector<1x1x2xi32> to vector<2xi32>
    %16 = vector.shape_cast %13 : vector<2xi32> to vector<1x1x2xi32>
    tpu.vector_store %arg4[%c0_7, %c0_8, %c0_9], %16 {strides = array<i32>} : memref<1x1x2xi32, #tpu.memory_space<vmem>>, vector<1x1x2xi32>,
    return
  }
  func.func @transform_0(%arg0: i32) -> (i32, i32) {
    %c0_i32 = arith.constant 0 : i32
    %c0_i32_0 = arith.constant 0 : i32
    return %arg0, %c0_i32 : i32, i32
  }
  func.func @transform_1(%arg0: i32) -> (i32, i32) {
    %c0_i32 = arith.constant 0 : i32
    %c0_i32_0 = arith.constant 0 : i32
    %c0_i32_1 = arith.constant 0 : i32
    return %c0_i32, %c0_i32_0 : i32, i32
  }
  func.func @transform_2(%arg0: i32) -> (i32, i32) {
    %c0_i32 = arith.constant 0 : i32
    %c0_i32_0 = arith.constant 0 : i32
    %c0_i32_1 = arith.constant 0 : i32
    return %c0_i32, %c0_i32_0 : i32, i32
  }
  func.func @transform_3(%arg0: i32) -> (i32, i32, i32) {
    %c0_i32 = arith.constant 0 : i32
    %c0_i32_0 = arith.constant 0 : i32
    %c0_i32_1 = arith.constant 0 : i32
    return %arg0, %c0_i32, %c0_i32_0 : i32, i32, i32
  }
}

</mosaic_0001>

<llo_original>
// kernel: tpu_custom_call.1
$region0: #{tpu_custom_call.1}
  #allocation0 [shape = 'u32[]', space=smem, size = 0x4, offset = 0x4, fixed_abs, tag = 'smem constant byte address 0x4 - core index']
  #allocation1 [shape = 'u32[144,128]{1,0:T(1,128)}', space=vmem, size = 0x12000, scoped, tag = 'internal scratch']
  %s0 = inlined_call_operand.hbm [shape: f32[2,768], index: 0, kind: input, shape index: {}]
  %s1 = inlined_call_operand.hbm [shape: f32[4,768], index: 1, kind: input, shape index: {}]
  %s2 = inlined_call_operand.vmem [shape: f32[1,4], index: 2, kind: input, shape index: {}]
  %s3 = inlined_call_operand.hbm [shape: s32[1,1,2], index: 3, kind: output, shape index: {}]
  %s4 = sld [smem:[#allocation0]]
  $region30: #{tpu_custom_call.1} parent=0
    _
  %s6 = ssub.s32 1, %s4
  %s7 = scalar_select 0, %s6, %s4
  $region1: #{tpu_custom_call.1} parent=0
    #allocation2 [shape = 'u8[6144]{0}', space=vmem, size = 0x1800, scoped, tag = 'input window, operand 0, single buffered']
    #allocation3 [shape = 's32[1]{0}', space=sflag, size = 0x4, scoped, tag = 'scoped memory for tpu_custom_call.1']
    #allocation4 [shape = 's32[1]{0}', space=sflag, size = 0x4, scoped, tag = 'scoped memory for tpu_custom_call.1']
    #allocation5 [shape = 'u8[12288]{0}', space=vmem, size = 0x3000, scoped, tag = 'input window, operand 1, single buffered']
    #allocation6 [shape = 's32[1]{0}', space=sflag, size = 0x4, scoped, tag = 'scoped memory for tpu_custom_call.1']
    #allocation7 [shape = 'u8[512]{0}', space=vmem, size = 0x400, scoped, tag = 'output window, operand 0, single buffered']
    %8 = vsyncpa [#allocation3], 0
    %9 = vsyncpa [#allocation6], 0
    %10 = vsyncpa [#allocation4], 0
    // Predicated region
    $region2: #{tpu_custom_call.1} parent=1 // pred_check
      _
    $region3: #{tpu_custom_call.1} parent=1 // pred_check_branch
      %12 = sbr.rel (0) target = $region5
    $region4: #{tpu_custom_call.1} parent=1 // pred_region
      %s14 = ssub.s32 192, 192
      %15 = vsyncadd [#allocation3], %s14
      %s17 = sshll.u32 [#allocation2], 4
      %s18 = int_to_ptr.vmem [resolvable:$true] %s17
      %20 = dma.hbm_to_vmem [thread:$0]  %s0, 192, %s18, [#allocation3]
    $region5: #{tpu_custom_call.1} parent=1 // pred_fallthru
      _
    // Predicated region
    $region6: #{tpu_custom_call.1} parent=1 // pred_check
      _
    $region7: #{tpu_custom_call.1} parent=1 // pred_check_branch
      %22 = sbr.rel (0) target = $region9
    $region8: #{tpu_custom_call.1} parent=1 // pred_region
      %s24 = ssub.s32 384, 384
      %25 = vsyncadd [#allocation6], %s24
      %s27 = sshll.u32 [#allocation5], 4
      %s28 = int_to_ptr.vmem [resolvable:$true] %s27
      %30 = dma.hbm_to_vmem [thread:$0]  %s1, 384, %s28, [#allocation6]
    $region9: #{tpu_custom_call.1} parent=1 // pred_fallthru
      _
    // Predicated region
    $region10: #{tpu_custom_call.1} parent=1 // pred_check
      _
    $region11: #{tpu_custom_call.1} parent=1 // pred_check_branch
      %32 = sbr.rel (0) target = $region13
    $region12: #{tpu_custom_call.1} parent=1 // pred_region
      _
    $region13: #{tpu_custom_call.1} parent=1 // pred_fallthru
      _
    // Predicated region
    $region14: #{tpu_custom_call.1} parent=1 // pred_check
      _
    $region15: #{tpu_custom_call.1} parent=1 // pred_check_branch
      %34 = sbr.rel (0) target = $region17
    $region16: #{tpu_custom_call.1} parent=1 // pred_region
      %35 = dma.done [#allocation3], 192
    $region17: #{tpu_custom_call.1} parent=1 // pred_fallthru
      _
    // Predicated region
    $region18: #{tpu_custom_call.1} parent=1 // pred_check
      _
    $region19: #{tpu_custom_call.1} parent=1 // pred_check_branch
      %37 = sbr.rel (0) target = $region21
    $region20: #{tpu_custom_call.1} parent=1 // pred_region
      %38 = dma.done [#allocation6], 384
    $region21: #{tpu_custom_call.1} parent=1 // pred_fallthru
      _
    %v39 = vld [vmem:[#allocation2] sm:$0xff]
    %v40 = vld [vmem:[#allocation2 + $0x8] sm:$0xf]
    %v41 = vld [vmem:[#allocation5] sm:$0xff]
    %v42 = vld [vmem:[#allocation5 + $0x8] sm:$0xff]
    %v43 = vld [vmem:[#allocation5 + $0x10] sm:$0xff]
    %v44 = vld [vmem:[%s2] sm:$0x1]
    %v46 = vlaneseq
    %v47 = vshrl.u32 %v46, 7
    %v48 = vsub.s32 0, %v47
    %v49 = vrot.slane %v44, %v48
    %v53 = vcombine.high %v39, %v39
    %v55 = vunpack.c.l.s4 1983009808
    %v56 = vunpack.c.0.s8 %v55
    %v57 = vlaneseq
    %v58 = vshrl.u32 %v57, 7
    %v59 = vsub.s32 %v56, %v58
    %v60 = vrot.slane %v39, %v59
    %v62 = vunpack.c.l.s4 1983009808
    %v63 = vunpack.c.0.s8 %v62
    %v64 = vlaneseq
    %v65 = vshrl.u32 %v64, 7
    %v66 = vsub.s32 %v63, %v65
    %v67 = vrot.slane %v53, %v66
    %v68 = vcombine.high %v60, %v60
    %v69 = vcombine.high %v67, %v67
    %v71 = vunpack.c.l.s4 1983009808
    %v72 = vunpack.c.0.s8 %v71
    %v73 = vlaneseq
    %v74 = vshrl.u32 %v73, 7
    %v75 = vsub.s32 %v72, %v74
    %v76 = vrot.slane %v40, %v75
    %v77 = vcombine.high %v76, %v76
    %v87 = vcombine.high %v41, %v41
    %v88 = vcombine.high %v42, %v42
    %v89 = vcombine.high %v43, %v43
    %93 = vmatprep.subr.mxu0 %v87
    %94 = vmatpush1.xpose.msra.mxu0 %v41
    %95 = vmatprep.subr.mxu0 0.0
    %96 = vmatpush1.xpose.msra.mxu0 0.0
    %97 = vmatprep.subr.mxu0 0.0
    %98 = vmatpush1.xpose.msra.mxu0 0.0
    %99 = vmatprep.subr.mxu0 0.0
    %100 = vmatpush1.xpose.msra.mxu0 0.0
    %101 = vmatprep.subr.mxu0 0.0
    %102 = vmatpush1.xpose.msra.mxu0 0.0
    %103 = vmatprep.subr.mxu0 0.0
    %104 = vmatpush1.xpose.msra.mxu0 0.0
    %105 = vmatprep.subr.mxu0 0.0
    %106 = vmatpush1.xpose.msra.mxu0 0.0
    %107 = vmatprep.subr.mxu0 0.0
    %108 = vmatpush1.xpose.msra.mxu0 0.0
    %109 = vmatprep.subr.mxu0 0.0
    %110 = vmatpush1.xpose.msra.mxu0 0.0
    %111 = vmatprep.subr.mxu0 0.0
    %112 = vmatpush1.xpose.msra.mxu0 0.0
    %113 = vmatprep.subr.mxu0 0.0
    %114 = vmatpush1.xpose.msra.mxu0 0.0
    %115 = vmatprep.subr.mxu0 0.0
    %116 = vmatpush1.xpose.msra.mxu0 0.0
    %117 = vmatprep.subr.mxu0 0.0
    %118 = vmatpush1.xpose.msra.mxu0 0.0
    %119 = vmatprep.subr.mxu0 0.0
    %120 = vmatpush1.xpose.msra.mxu0 0.0
    %121 = vmatprep.subr.mxu0 0.0
    %122 = vmatpush1.xpose.msra.mxu0 0.0
    %123 = vmatprep.subr.mxu0 0.0
    %124 = vmatpush1.xpose.msra.mxu0 0.0
    %125 = vmatprep.subr.mxu0 0.0
    %126 = vmatpush1.xpose.msra.mxu0 0.0
    %127 = vmatprep.subr.mxu0 0.0
    %128 = vmatpush1.xpose.msra.mxu0 0.0
    %129 = vmatprep.subr.mxu0 0.0
    %130 = vmatpush1.xpose.msra.mxu0 0.0
    %131 = vmatprep.subr.mxu0 0.0
    %132 = vmatpush1.xpose.msra.mxu0 0.0
    %133 = vmatprep.subr.mxu0 0.0
    %134 = vmatpush1.xpose.msra.mxu0 0.0
    %135 = vmatprep.subr.mxu0 0.0
    %136 = vmatpush1.xpose.msra.mxu0 0.0
    %137 = vmatprep.subr.mxu0 0.0
    %138 = vmatpush1.xpose.msra.mxu0 0.0
    %139 = vmatprep.subr.mxu0 0.0
    %140 = vmatpush1.xpose.msra.mxu0 0.0
    %141 = vmatprep.subr.mxu0 0.0
    %142 = vmatpush1.xpose.msra.mxu0 0.0
    %143 = vmatprep.subr.mxu0 0.0
    %144 = vmatpush1.xpose.msra.mxu0 0.0
    %145 = vmatprep.subr.mxu0 0.0
    %146 = vmatpush1.xpose.msra.mxu0 0.0
    %147 = vmatprep.subr.mxu0 0.0
    %148 = vmatpush1.xpose.msra.mxu0 0.0
    %149 = vmatprep.subr.mxu0 0.0
    %150 = vmatpush1.xpose.msra.mxu0 0.0
    %151 = vmatprep.subr.mxu0 0.0
    %152 = vmatpush1.xpose.msra.mxu0 0.0
    %153 = vmatprep.subr.mxu0 0.0
    %154 = vmatpush1.xpose.msra.mxu0 0.0
    %155 = vmatprep.subr.mxu0 0.0
    %156 = vmatpush1.xpose.msra.mxu0 0.0
    %157 = vmatprep.mubr.f32.mxu0 %v68
    %158 = vmatmul.mubr.f32.gmra.mrb[0].mxu0 %v60
    %v159 = vpop.f32.mrb[0].mxu0
    %v160 = vadd.f32 %v49, %v159
    %v161 = vpop.f32.mrb[0].mxu0
    %162 = vdwg.mxu0
    %163 = vmatprep.subr.mxu0 %v88
    %164 = vmatpush1.xpose.msra.mxu0 %v42
    %165 = vmatprep.subr.mxu0 0.0
    %166 = vmatpush1.xpose.msra.mxu0 0.0
    %167 = vmatprep.subr.mxu0 0.0
    %168 = vmatpush1.xpose.msra.mxu0 0.0
    %169 = vmatprep.subr.mxu0 0.0
    %170 = vmatpush1.xpose.msra.mxu0 0.0
    %171 = vmatprep.subr.mxu0 0.0
    %172 = vmatpush1.xpose.msra.mxu0 0.0
    %173 = vmatprep.subr.mxu0 0.0
    %174 = vmatpush1.xpose.msra.mxu0 0.0
    %175 = vmatprep.subr.mxu0 0.0
    %176 = vmatpush1.xpose.msra.mxu0 0.0
    %177 = vmatprep.subr.mxu0 0.0
    %178 = vmatpush1.xpose.msra.mxu0 0.0
    %179 = vmatprep.subr.mxu0 0.0
    %180 = vmatpush1.xpose.msra.mxu0 0.0
    %181 = vmatprep.subr.mxu0 0.0
    %182 = vmatpush1.xpose.msra.mxu0 0.0
    %183 = vmatprep.subr.mxu0 0.0
    %184 = vmatpush1.xpose.msra.mxu0 0.0
    %185 = vmatprep.subr.mxu0 0.0
    %186 = vmatpush1.xpose.msra.mxu0 0.0
    %187 = vmatprep.subr.mxu0 0.0
    %188 = vmatpush1.xpose.msra.mxu0 0.0
    %189 = vmatprep.subr.mxu0 0.0
    %190 = vmatpush1.xpose.msra.mxu0 0.0
    %191 = vmatprep.subr.mxu0 0.0
    %192 = vmatpush1.xpose.msra.mxu0 0.0
    %193 = vmatprep.subr.mxu0 0.0
    %194 = vmatpush1.xpose.msra.mxu0 0.0
    %195 = vmatprep.subr.mxu0 0.0
    %196 = vmatpush1.xpose.msra.mxu0 0.0
    %197 = vmatprep.subr.mxu0 0.0
    %198 = vmatpush1.xpose.msra.mxu0 0.0
    %199 = vmatprep.subr.mxu0 0.0
    %200 = vmatpush1.xpose.msra.mxu0 0.0
    %201 = vmatprep.subr.mxu0 0.0
    %202 = vmatpush1.xpose.msra.mxu0 0.0
    %203 = vmatprep.subr.mxu0 0.0
    %204 = vmatpush1.xpose.msra.mxu0 0.0
    %205 = vmatprep.subr.mxu0 0.0
    %206 = vmatpush1.xpose.msra.mxu0 0.0
    %207 = vmatprep.subr.mxu0 0.0
    %208 = vmatpush1.xpose.msra.mxu0 0.0
    %209 = vmatprep.subr.mxu0 0.0
    %210 = vmatpush1.xpose.msra.mxu0 0.0
    %211 = vmatprep.subr.mxu0 0.0
    %212 = vmatpush1.xpose.msra.mxu0 0.0
    %213 = vmatprep.subr.mxu0 0.0
    %214 = vmatpush1.xpose.msra.mxu0 0.0
    %215 = vmatprep.subr.mxu0 0.0
    %216 = vmatpush1.xpose.msra.mxu0 0.0
    %217 = vmatprep.subr.mxu0 0.0
    %218 = vmatpush1.xpose.msra.mxu0 0.0
    %219 = vmatprep.subr.mxu0 0.0
    %220 = vmatpush1.xpose.msra.mxu0 0.0
    %221 = vmatprep.subr.mxu0 0.0
    %222 = vmatpush1.xpose.msra.mxu0 0.0
    %223 = vmatprep.subr.mxu0 0.0
    %224 = vmatpush1.xpose.msra.mxu0 0.0
    %225 = vmatprep.subr.mxu0 0.0
    %226 = vmatpush1.xpose.msra.mxu0 0.0
    %227 = vmatprep.mubr.f32.mxu0 %v69
    %228 = vmatmul.mubr.f32.gmra.mrb[0].mxu0 %v67
    %v229 = vpop.f32.mrb[0].mxu0
    %v230 = vadd.f32 %v160, %v229
    %v231 = vpop.f32.mrb[0].mxu0
    %232 = vdwg.mxu0
    %233 = vmatprep.subr.mxu0 %v89
    %234 = vmatpush1.xpose.msra.mxu0 %v43
    %235 = vmatprep.subr.mxu0 0.0
    %236 = vmatpush1.xpose.msra.mxu0 0.0
    %237 = vmatprep.subr.mxu0 0.0
    %238 = vmatpush1.xpose.msra.mxu0 0.0
    %239 = vmatprep.subr.mxu0 0.0
    %240 = vmatpush1.xpose.msra.mxu0 0.0
    %241 = vmatprep.subr.mxu0 0.0
    %242 = vmatpush1.xpose.msra.mxu0 0.0
    %243 = vmatprep.subr.mxu0 0.0
    %244 = vmatpush1.xpose.msra.mxu0 0.0
    %245 = vmatprep.subr.mxu0 0.0
    %246 = vmatpush1.xpose.msra.mxu0 0.0
    %247 = vmatprep.subr.mxu0 0.0
    %248 = vmatpush1.xpose.msra.mxu0 0.0
    %249 = vmatprep.subr.mxu0 0.0
    %250 = vmatpush1.xpose.msra.mxu0 0.0
    %251 = vmatprep.subr.mxu0 0.0
    %252 = vmatpush1.xpose.msra.mxu0 0.0
    %253 = vmatprep.subr.mxu0 0.0
    %254 = vmatpush1.xpose.msra.mxu0 0.0
    %255 = vmatprep.subr.mxu0 0.0
    %256 = vmatpush1.xpose.msra.mxu0 0.0
    %257 = vmatprep.subr.mxu0 0.0
    %258 = vmatpush1.xpose.msra.mxu0 0.0
    %259 = vmatprep.subr.mxu0 0.0
    %260 = vmatpush1.xpose.msra.mxu0 0.0
    %261 = vmatprep.subr.mxu0 0.0
    %262 = vmatpush1.xpose.msra.mxu0 0.0
    %263 = vmatprep.subr.mxu0 0.0
    %264 = vmatpush1.xpose.msra.mxu0 0.0
    %265 = vmatprep.subr.mxu0 0.0
    %266 = vmatpush1.xpose.msra.mxu0 0.0
    %267 = vmatprep.subr.mxu0 0.0
    %268 = vmatpush1.xpose.msra.mxu0 0.0
    %269 = vmatprep.subr.mxu0 0.0
    %270 = vmatpush1.xpose.msra.mxu0 0.0
    %271 = vmatprep.subr.mxu0 0.0
    %272 = vmatpush1.xpose.msra.mxu0 0.0
    %273 = vmatprep.subr.mxu0 0.0
    %274 = vmatpush1.xpose.msra.mxu0 0.0
    %275 = vmatprep.subr.mxu0 0.0
    %276 = vmatpush1.xpose.msra.mxu0 0.0
    %277 = vmatprep.subr.mxu0 0.0
    %278 = vmatpush1.xpose.msra.mxu0 0.0
    %279 = vmatprep.subr.mxu0 0.0
    %280 = vmatpush1.xpose.msra.mxu0 0.0
    %281 = vmatprep.subr.mxu0 0.0
    %282 = vmatpush1.xpose.msra.mxu0 0.0
    %283 = vmatprep.subr.mxu0 0.0
    %284 = vmatpush1.xpose.msra.mxu0 0.0
    %285 = vmatprep.subr.mxu0 0.0
    %286 = vmatpush1.xpose.msra.mxu0 0.0
    %287 = vmatprep.subr.mxu0 0.0
    %288 = vmatpush1.xpose.msra.mxu0 0.0
    %289 = vmatprep.subr.mxu0 0.0
    %290 = vmatpush1.xpose.msra.mxu0 0.0
    %291 = vmatprep.subr.mxu0 0.0
    %292 = vmatpush1.xpose.msra.mxu0 0.0
    %293 = vmatprep.subr.mxu0 0.0
    %294 = vmatpush1.xpose.msra.mxu0 0.0
    %295 = vmatprep.subr.mxu0 0.0
    %296 = vmatpush1.xpose.msra.mxu0 0.0
    %297 = vmatprep.mubr.f32.mxu0 %v77
    %298 = vmatmul.mubr.f32.gmra.mrb[0].mxu0 %v76
    %v299 = vpop.f32.mrb[0].mxu0
    %v300 = vadd.f32 %v230, %v299
    %v301 = vpop.f32.mrb[0].mxu0
    %302 = vdwg.mxu0
    %vm303 = vcmask 25600
    %v304 = vsel %vm303, %v300, -inf
    %305 = vmax.xlane.f32.xlu0 %v304
    %v306 = vpop.xlane.xlu0 %305
    %v307 = vlaneseq
    %v308 = vand.u32 %v307, 127
    %vm309 = vcmp.eq.f32.partialorder %v300, %v306
    %v310 = vsel %vm309, %v308, 2147483647
    %v311 = vsel %vm303, %v310, 2147483647
    %v312 = vand.u32 %v311, 65535
    %v313 = vshra.s32 %v311, 16
    %v314 = vcvt.s32.f32 %v312
    %v315 = vcvt.s32.f32 %v313
    %316 = vmin.xlane.f32.xlu0 %v315
    %v317 = vpop.xlane.xlu0 %316
    %vm318 = vcmp.eq.f32.partialorder %v315, %v317
    %v319 = vsel %vm318, %v314, inf
    %320 = vmin.xlane.f32.xlu0 %v319
    %v321 = vpop.xlane.xlu0 %320
    %v322 = vcvt.f32.s32 %v321
    %v323 = vcvt.f32.s32 %v317
    %v324 = vshll.u32 %v323, 16
    %v325 = vadd.s32 %v324, %v322
    %v326 = vlaneseq
    %v327 = vshrl.u32 %v326, 7
    %v328 = vsub.s32 %v308, %v327
    %v329 = vrot.slane %v325, %v328
    %vm330 = vcmask 8192
    %331 = vst.msk [vmem:[#allocation7] sm:$0x1] %vm330, %v329
    // Predicated region
    $region22: #{tpu_custom_call.1} parent=1 // pred_check
      _
    $region23: #{tpu_custom_call.1} parent=1 // pred_check_branch
      %333 = sbr.rel (0) target = $region25
    $region24: #{tpu_custom_call.1} parent=1 // pred_region
      %s335 = ssub.s32 16, 16
      %336 = vsyncadd [#allocation4], %s335
      %s338 = sshll.u32 [#allocation7], 4
      %s339 = int_to_ptr.vmem [resolvable:$true] %s338
      %341 = dma.vmem_to_hbm [thread:$0]  %s339, 16, %s3, [#allocation4]
    $region25: #{tpu_custom_call.1} parent=1 // pred_fallthru
      _
    // Predicated region
    $region26: #{tpu_custom_call.1} parent=1 // pred_check
      _
    $region27: #{tpu_custom_call.1} parent=1 // pred_check_branch
      %343 = sbr.rel (0) target = $region29
    $region28: #{tpu_custom_call.1} parent=1 // pred_region
      %344 = dma.done [#allocation4], 16
    $region29: #{tpu_custom_call.1} parent=1 // pred_fallthru
      _
    %345 = vsyncpa [#allocation3], 1
    %346 = vsyncpa [#allocation6], 1
    %347 = vsyncpa [#allocation4], 1

</llo_original>
